<compile_context>
chip_gen: v7x
topology: tpu7x:2x2x1
jax: 0.10.0
libtpu: 0.0.40
codegen_flags: <defaults>
</compile_context>

<pallas_src>
import jax
import jax.numpy as jnp
from jax.experimental import pallas as pl
from jax.experimental.pallas import tpu as pltpu


# ----------------------------------------------------------------------------
# Kernel
# ----------------------------------------------------------------------------
def _make_gcn_kernel(layer_dims, adj_dtype):
    """Fused multi-layer GCN kernel.

    layer_dims: static list of (c_in, c_out) per layer.
    adj_dtype:  dtype of A_hat^T and of the operand fed to the Np^2 matmul.
    """
    num_layers = len(layer_dims)

    def kernel(xT_ref, aT_ref, *refs):
        # refs = (w_0, b_0, ..., w_{L-1}, b_{L-1}, out_ref)
        out_ref = refs[-1]
        params = refs[:-1]

        aT = aT_ref[...]                  # [Np, Np] A_hat^T (bf16 by default)
        h = xT_ref[...]                   # [C0, Np] f32, nodes on lanes

        for l, (c_in, c_out) in enumerate(layer_dims):
            w = params[2 * l][...]        # [C_out, C_in]  f32
            b = params[2 * l + 1][...]    # [C_out, 1]     f32

            # Choose the order so the Np^2-scaled matmul carries
            # min(C_in, C_out) rows through the MXU.
            if c_in <= c_out:
                # Aggregate first: (H^T @ A_hat^T), then W @ (.)
                agg = jnp.dot(h.astype(adj_dtype), aT,
                              preferred_element_type=jnp.float32)      # [C_in, Np]
                t = jnp.dot(w, agg,
                            preferred_element_type=jnp.float32)        # [C_out, Np]
            else:
                # Transform first: W @ H^T, then (.) @ A_hat^T
                t = jnp.dot(w, h,
                            preferred_element_type=jnp.float32)        # [C_out, Np]
                t = jnp.dot(t.astype(adj_dtype), aT,
                            preferred_element_type=jnp.float32)

            t = t + b                     # bias broadcast across lanes, f32
            if l < num_layers - 1:
                # ReLU in f32 (v5e has no bf16 VPU); H stays f32 between layers
                # (C*Np is tiny next to aT, and it keeps precision).
                h = jnp.maximum(t, 0.0)
            else:
                h = t

        # Lane-dense [c_out_last, Np] store (unmasked vst).
        out_ref[...] = jax.nn.sigmoid(h)

    return kernel


# ----------------------------------------------------------------------------
# Wrapper-side graph preprocessing (pure JAX, single pass over N^2)
# ----------------------------------------------------------------------------
def _normalized_adjacency_T(edge_index, edge_weight, num_nodes, num_nodes_pad,
                            out_dtype):
    """Build A_hat^T = (D^-1/2 (A+I) D^-1/2)^T directly at padded size.

    One scatter (self-loops appended as edges), one reduction (degree),
    one fused scale+cast. Padded rows/cols stay exactly zero, which is what
    isolates padded lanes inside the kernel -- do NOT change to eye-padding.
    Duplicate edges are summed (matches PyG scatter-add semantics).
    """
    src = edge_index[0].astype(jnp.int32)
    dst = edge_index[1].astype(jnp.int32)
    if edge_weight is None:
        ew = jnp.ones(src.shape, jnp.float32)
    else:
        ew = edge_weight.astype(jnp.float32)

    loops = jnp.arange(num_nodes, dtype=jnp.int32)
    src = jnp.concatenate([src, loops])
    dst = jnp.concatenate([dst, loops])
    ew = jnp.concatenate([ew, jnp.ones((num_nodes,), jnp.float32)])

    # A_hat rows = target, cols = source  =>  A_hat^T[src, dst].
    aT = jnp.zeros((num_nodes_pad, num_nodes_pad), jnp.float32)
    aT = aT.at[src, dst].add(ew)

    # deg[target] = row-sums of (A+I) = column-sums of (A+I)^T; padded -> 0.
    deg = aT.sum(axis=0)
    dinv = jnp.where(deg > 0, jax.lax.rsqrt(deg), 0.0)

    # Symmetric D^-1/2 scaling commutes with transpose; fuse with dtype cast.
    return (dinv[:, None] * aT * dinv[None, :]).astype(out_dtype)


# ----------------------------------------------------------------------------
# Forward
# ----------------------------------------------------------------------------
def gcn_regression_forward(x, edge_index, edge_weight, weights, biases,
                           *, adjacency_dtype=jnp.bfloat16):
    """Pallas GCNRegression forward.

    x:          [N, C0] float32 node features
    edge_index: [2, E]  int32   (row 0 = source, row 1 = target)
    edge_weight:[E] or None
    weights:    list of [C_{l+1}, C_l]  (PyTorch/PyG-native [out, in] layout)
    biases:     list of [C_{l+1}, 1] (or [C_{l+1}])
    adjacency_dtype: dtype of A_hat^T / aggregation operand (bf16 default;
                     f32 available for bit-tighter results). Accum is f32.
    """
    n, _ = x.shape
    layer_dims = [(w.shape[1], w.shape[0]) for w in weights]  # (c_in, c_out)
    c_last = weights[-1].shape[0]

    # Pad the node axis to a lane-dense multiple of 128 (handles any N).
    n_pad = pl.cdiv(n, 128) * 128

    aT = _normalized_adjacency_T(edge_index, edge_weight, n, n_pad,
                                 adjacency_dtype)                      # [Np, Np]
    xT = jnp.pad(x.T.astype(jnp.float32), ((0, 0), (0, n_pad - n)))    # [C0, Np]

    flat_params = []
    for w, b in zip(weights, biases):
        flat_params.append(w.astype(jnp.float32))                 # [C_out, C_in]
        flat_params.append(jnp.reshape(b, (-1, 1)).astype(jnp.float32))

    # --- VMEM budget (aT dominates: Np^2 * adjacency-dtype bytes) -----------
    def _nbytes(a):
        return int(a.size) * a.dtype.itemsize

    resident = (_nbytes(aT) + _nbytes(xT)
                + sum(_nbytes(p) for p in flat_params)
                + c_last * n_pad * 4)                              # f32 output
    try:
        vmem_cap = int(pltpu.get_tpu_info().vmem_capacity_bytes)
    except Exception:
        vmem_cap = 64 << 20   # conservative: v7x has 64 MiB per TensorCore
    if resident > int(0.8 * vmem_cap):
        # TODO(synk): switch to the emit_pipeline-streamed-aT path (see header)
        # instead of failing for large graphs.
        raise NotImplementedError(
            f"graph too large for the single-shot VMEM-resident kernel: "
            f"needs ~{resident} B of {vmem_cap} B VMEM")
    vmem_limit = min(vmem_cap, resident + (16 << 20))

    kernel = _make_gcn_kernel(layer_dims, adjacency_dtype)
    num_inputs = 2 + len(flat_params)

    # Whole (padded) graph in one grid-less kernel invocation: the L-layer
    # chain couples all nodes through A_hat, which is DMA'd once and stays
    # VMEM-resident across layers (no per-grid-step overhead).
    outT = pl.pallas_call(
        kernel,
        out_shape=jax.ShapeDtypeStruct((c_last, n_pad), jnp.float32),
        in_specs=[pl.BlockSpec(memory_space=pltpu.MemorySpace.VMEM)
                  for _ in range(num_inputs)],
        out_specs=pl.BlockSpec(memory_space=pltpu.MemorySpace.VMEM),
        compiler_params=pltpu.CompilerParams(vmem_limit_bytes=vmem_limit),
    )(xT, aT, *flat_params)

    return outT[:, :n].T                 # back to [N, c_out_last]


# ----------------------------------------------------------------------------
# Plain-JAX reference and parameter init
# ----------------------------------------------------------------------------
def gcn_regression_reference(x, edge_index, edge_weight, weights, biases):
    n = x.shape[0]
    src, dst = edge_index[0], edge_index[1]
    ew = jnp.ones(src.shape, jnp.float32) if edge_weight is None \
        else edge_weight.astype(jnp.float32)
    a = jnp.zeros((n, n), jnp.float32).at[dst, src].add(ew)
    a = a + jnp.eye(n, dtype=jnp.float32)
    deg = a.sum(axis=1)
    dinv = jnp.where(deg > 0, jax.lax.rsqrt(deg), 0.0)
    a_hat = dinv[:, None] * a * dinv[None, :]

    h = x
    num_layers = len(weights)
    with jax.default_matmul_precision("float32"):
        for l, (w, b) in enumerate(zip(weights, biases)):
            h = a_hat @ (h @ w.T) + jnp.reshape(b, (1, -1))
            if l < num_layers - 1:
                h = jnp.maximum(h, 0.0)
    return jax.nn.sigmoid(h)


def init_params(key, num_channels):
    """GCNConv-style init: glorot weights [out, in]; small random biases."""
    weights, biases = [], []
    for l in range(len(num_channels) - 1):
        c_in, c_out = num_channels[l], num_channels[l + 1]
        key, kw, kb = jax.random.split(key, 3)
        bound = jnp.sqrt(6.0 / (c_in + c_out))
        w = jax.random.uniform(kw, (c_out, c_in), jnp.float32, -bound, bound)
        b = jax.random.uniform(kb, (c_out, 1), jnp.float32, -0.1, 0.1)
        weights.append(w)
        biases.append(b)
    return weights, biases


# ----------------------------------------------------------------------------
# Demo / self-check
# ----------------------------------------------------------------------------
if __name__ == "__main__":
    key = jax.random.PRNGKey(0)

    num_channels = [4, 32, 32, 1]     # 3 GCNConv layers
    N = 16                            # number of nodes

    # Deterministic small undirected graph: a 16-node ring plus two chords.
    ring_src = jnp.arange(N, dtype=jnp.int32)
    ring_dst = (ring_src + 1) % N
    chord_src = jnp.array([0, 4], dtype=jnp.int32)
    chord_dst = jnp.array([8, 12], dtype=jnp.int32)
    src = jnp.concatenate([ring_src, chord_src])
    dst = jnp.concatenate([ring_dst, chord_dst])
    edge_index = jnp.stack([jnp.concatenate([src, dst]),
                            jnp.concatenate([dst, src])])     # [2, 36]

    key, kp, kx = jax.random.split(key, 3)
    weights, biases = init_params(kp, num_channels)
    x = jax.random.normal(kx, (N, num_channels[0]), jnp.float32)

    ref = gcn_regression_reference(x, edge_index, None, weights, biases)

    # Default path: bf16 adjacency / aggregation operand, f32 accumulation.
    out = gcn_regression_forward(x, edge_index, None, weights, biases)
    out = jax.block_until_ready(out)
    assert out.shape == (N, num_channels[-1])
    assert jnp.allclose(out, ref, atol=5e-2), \
        float(jnp.max(jnp.abs(out - ref)))
    # NOTE: bf16 adjacency only validated at atol=5e-2 on this toy graph;
    # re-validate on a realistic graph before relying on it, or pass
    # adjacency_dtype=jnp.float32.

    # f32-adjacency path (tighter check; loose-ish tolerance reflects MXU
    # bf16-pass decomposition of f32 matmuls vs the XLA reference dot).
    out_f32 = gcn_regression_forward(x, edge_index, None, weights, biases,
                                     adjacency_dtype=jnp.float32)
    out_f32 = jax.block_until_ready(out_f32)
    assert out_f32.shape == (N, num_channels[-1])
    assert jnp.allclose(out_f32, ref, atol=1e-2, rtol=1e-2), \
        float(jnp.max(jnp.abs(out_f32 - ref)))

    print("KERNEL_OK")
</pallas_src>

<mosaic_0001>
module attributes {stable_mosaic.version = 11 : i64} {
  func.func @kernel(%arg0: memref<4x128xf32, #tpu.memory_space<vmem>>, %arg1: memref<128x128xbf16, #tpu.memory_space<vmem>>, %arg2: memref<32x4xf32, #tpu.memory_space<vmem>>, %arg3: memref<32x1xf32, #tpu.memory_space<vmem>>, %arg4: memref<32x32xf32, #tpu.memory_space<vmem>>, %arg5: memref<32x1xf32, #tpu.memory_space<vmem>>, %arg6: memref<1x32xf32, #tpu.memory_space<vmem>>, %arg7: memref<1x1xf32, #tpu.memory_space<vmem>>, %arg8: memref<1x128xf32, #tpu.memory_space<vmem>>) attributes {dimension_semantics = [], scalar_prefetch = 0 : i64, scratch_operands = 0 : i64, tpu.core_type = #tpu.core_type<tc>} {
    %c0 = arith.constant 0 : index
    %c0_0 = arith.constant 0 : index
    %0 = vector.load %arg1[%c0, %c0_0] : memref<128x128xbf16, #tpu.memory_space<vmem>>, vector<128x128xbf16>
    %c0_1 = arith.constant 0 : index
    %c0_2 = arith.constant 0 : index
    %1 = vector.load %arg0[%c0_1, %c0_2] : memref<4x128xf32, #tpu.memory_space<vmem>>, vector<4x128xf32>
    %c0_3 = arith.constant 0 : index
    %c0_4 = arith.constant 0 : index
    %2 = vector.load %arg2[%c0_3, %c0_4] : memref<32x4xf32, #tpu.memory_space<vmem>>, vector<32x4xf32>
    %c0_5 = arith.constant 0 : index
    %c0_6 = arith.constant 0 : index
    %3 = vector.load %arg3[%c0_5, %c0_6] : memref<32x1xf32, #tpu.memory_space<vmem>>, vector<32x1xf32>
    %4 = arith.truncf %1 : vector<4x128xf32> to vector<4x128xbf16>
    %cst = arith.constant dense<0.000000e+00> : vector<4x128xf32>
    %5 = tpu.matmul %4, %0, %cst {dimension_numbers = #tpu.dot_dimension_numbers<[1], [0], [0], [1], [0, 0, 1, 1], [], []>} : vector<4x128xbf16>, vector<128x128xbf16>, vector<4x128xf32> -> vector<4x128xf32>
    %cst_7 = arith.constant dense<0.000000e+00> : vector<32x128xf32>
    %6 = tpu.matmul %2, %5, %cst_7 {dimension_numbers = #tpu.dot_dimension_numbers<[1], [0], [0], [1], [0, 0, 1, 1], [], []>} : vector<32x4xf32>, vector<4x128xf32>, vector<32x128xf32> -> vector<32x128xf32>
    %7 = vector.broadcast %3 : vector<32x1xf32> to vector<32x128xf32>
    %8 = arith.addf %6, %7 : vector<32x128xf32>
    %cst_8 = arith.constant 0.000000e+00 : f32
    %9 = vector.broadcast %cst_8 : f32 to vector<32x128xf32>
    %10 = arith.maximumf %8, %9 : vector<32x128xf32>
    %c0_9 = arith.constant 0 : index
    %c0_10 = arith.constant 0 : index
    %11 = vector.load %arg4[%c0_9, %c0_10] : memref<32x32xf32, #tpu.memory_space<vmem>>, vector<32x32xf32>
    %c0_11 = arith.constant 0 : index
    %c0_12 = arith.constant 0 : index
    %12 = vector.load %arg5[%c0_11, %c0_12] : memref<32x1xf32, #tpu.memory_space<vmem>>, vector<32x1xf32>
    %13 = arith.truncf %10 : vector<32x128xf32> to vector<32x128xbf16>
    %cst_13 = arith.constant dense<0.000000e+00> : vector<32x128xf32>
    %14 = tpu.matmul %13, %0, %cst_13 {dimension_numbers = #tpu.dot_dimension_numbers<[1], [0], [0], [1], [0, 0, 1, 1], [], []>} : vector<32x128xbf16>, vector<128x128xbf16>, vector<32x128xf32> -> vector<32x128xf32>
    %cst_14 = arith.constant dense<0.000000e+00> : vector<32x128xf32>
    %15 = tpu.matmul %11, %14, %cst_14 {dimension_numbers = #tpu.dot_dimension_numbers<[1], [0], [0], [1], [0, 0, 1, 1], [], []>} : vector<32x32xf32>, vector<32x128xf32>, vector<32x128xf32> -> vector<32x128xf32>
    %16 = vector.broadcast %12 : vector<32x1xf32> to vector<32x128xf32>
    %17 = arith.addf %15, %16 : vector<32x128xf32>
    %cst_15 = arith.constant 0.000000e+00 : f32
    %18 = vector.broadcast %cst_15 : f32 to vector<32x128xf32>
    %19 = arith.maximumf %17, %18 : vector<32x128xf32>
    %c0_16 = arith.constant 0 : index
    %c0_17 = arith.constant 0 : index
    %20 = vector.load %arg6[%c0_16, %c0_17] : memref<1x32xf32, #tpu.memory_space<vmem>>, vector<1x32xf32>
    %c0_18 = arith.constant 0 : index
    %c0_19 = arith.constant 0 : index
    %21 = vector.load %arg7[%c0_18, %c0_19] : memref<1x1xf32, #tpu.memory_space<vmem>>, vector<1x1xf32>
    %cst_20 = arith.constant dense<0.000000e+00> : vector<1x128xf32>
    %22 = tpu.matmul %20, %19, %cst_20 {dimension_numbers = #tpu.dot_dimension_numbers<[1], [0], [0], [1], [0, 0, 1, 1], [], []>} : vector<1x32xf32>, vector<32x128xf32>, vector<1x128xf32> -> vector<1x128xf32>
    %23 = arith.truncf %22 : vector<1x128xf32> to vector<1x128xbf16>
    %cst_21 = arith.constant dense<0.000000e+00> : vector<1x128xf32>
    %24 = tpu.matmul %23, %0, %cst_21 {dimension_numbers = #tpu.dot_dimension_numbers<[1], [0], [0], [1], [0, 0, 1, 1], [], []>} : vector<1x128xbf16>, vector<128x128xbf16>, vector<1x128xf32> -> vector<1x128xf32>
    %25 = vector.broadcast %21 : vector<1x1xf32> to vector<1x128xf32>
    %26 = arith.addf %24, %25 : vector<1x128xf32>
    %27 = arith.negf %26 : vector<1x128xf32>
    %28 = math.exp %27 : vector<1x128xf32>
    %cst_22 = arith.constant 1.000000e+00 : f32
    %29 = vector.broadcast %cst_22 : f32 to vector<1x128xf32>
    %30 = arith.addf %29, %28 : vector<1x128xf32>
    %31 = arith.divf %29, %30 : vector<1x128xf32>
    %c0_23 = arith.constant 0 : index
    %c0_24 = arith.constant 0 : index
    %32 = vector.load %arg8[%c0_23, %c0_24] : memref<1x128xf32, #tpu.memory_space<vmem>>, vector<1x128xf32>
    tpu.vector_store %arg8[%c0_23, %c0_24], %31 {strides = array<i32>} : memref<1x128xf32, #tpu.memory_space<vmem>>, vector<1x128xf32>,
    return
  }
}

</mosaic_0001>

<llo_original>
// kernel: tpu_custom_call.1
$region0: #{tpu_custom_call.1}
  #allocation0 [shape = 'u32[]', space=smem, size = 0x4, offset = 0x4, fixed_abs, tag = 'smem constant byte address 0x4 - core index']
  #allocation1 [shape = 'u32[144,128]{1,0:T(1,128)}', space=vmem, size = 0x12000, scoped, tag = 'internal scratch']
  #allocation2 [shape = 'f32[1,1]{1,0:T(1,128)S(1)}', space=vmem, size = 0x200, scoped, tag = 'scoped memory for tpu_custom_call.1']
  %s0 = inlined_call_operand.vmem [shape: f32[4,128], index: 0, kind: input, shape index: {}]
  %s1 = inlined_call_operand.vmem [shape: bf16[128,128], index: 1, kind: input, shape index: {}]
  %s2 = inlined_call_operand.vmem [shape: f32[32,4], index: 2, kind: input, shape index: {}]
  %s3 = inlined_call_operand.vmem [shape: f32[32,1], index: 3, kind: input, shape index: {}]
  %s4 = inlined_call_operand.vmem [shape: f32[32,32], index: 4, kind: input, shape index: {}]
  %s5 = inlined_call_operand.vmem [shape: f32[32,1], index: 5, kind: input, shape index: {}]
  %s6 = inlined_call_operand.vmem [shape: f32[1,32], index: 6, kind: input, shape index: {}]
  %s7 = inlined_call_operand.<no memory space> [shape: f32[1,1], index: 7, kind: input, shape index: {}]
  %s8 = inlined_call_operand.hbm [shape: f32[1,128], index: 8, kind: output, shape index: {}]
  %s9 = sld [smem:[#allocation0]]
  $region42: #{tpu_custom_call.1} parent=0
    _
  %s11 = ssub.s32 1, %s9
  %s12 = scalar_select 0, %s11, %s9
  %v13 = vstv %s7
  %14 = vst [vmem:[#allocation2] sm:$0x1] %v13
  $region1: #{tpu_custom_call.1} parent=0
    #allocation3 [shape = 'u8[512]{0}', space=vmem, size = 0x400, scoped, tag = 'output window, operand 0, single buffered']
    #allocation4 [shape = 's32[1]{0}', space=sflag, size = 0x4, scoped, tag = 'scoped memory for tpu_custom_call.1']
    %15 = vsyncpa [#allocation4], 0
    // Predicated region
    $region2: #{tpu_custom_call.1} parent=1 // pred_check
      _
    $region3: #{tpu_custom_call.1} parent=1 // pred_check_branch
      %17 = sbr.rel (0) target = $region5
    $region4: #{tpu_custom_call.1} parent=1 // pred_region
      _
    $region5: #{tpu_custom_call.1} parent=1 // pred_fallthru
      _
    // Predicated region
    $region6: #{tpu_custom_call.1} parent=1 // pred_check
      _
    $region7: #{tpu_custom_call.1} parent=1 // pred_check_branch
      %19 = sbr.rel (0) target = $region9
    $region8: #{tpu_custom_call.1} parent=1 // pred_region
      _
    $region9: #{tpu_custom_call.1} parent=1 // pred_fallthru
      _
    // Predicated region
    $region10: #{tpu_custom_call.1} parent=1 // pred_check
      _
    $region11: #{tpu_custom_call.1} parent=1 // pred_check_branch
      %21 = sbr.rel (0) target = $region13
    $region12: #{tpu_custom_call.1} parent=1 // pred_region
      _
    $region13: #{tpu_custom_call.1} parent=1 // pred_fallthru
      _
    // Predicated region
    $region14: #{tpu_custom_call.1} parent=1 // pred_check
      _
    $region15: #{tpu_custom_call.1} parent=1 // pred_check_branch
      %23 = sbr.rel (0) target = $region17
    $region16: #{tpu_custom_call.1} parent=1 // pred_region
      _
    $region17: #{tpu_custom_call.1} parent=1 // pred_fallthru
      _
    // Predicated region
    $region18: #{tpu_custom_call.1} parent=1 // pred_check
      _
    $region19: #{tpu_custom_call.1} parent=1 // pred_check_branch
      %25 = sbr.rel (0) target = $region21
    $region20: #{tpu_custom_call.1} parent=1 // pred_region
      _
    $region21: #{tpu_custom_call.1} parent=1 // pred_fallthru
      _
    // Predicated region
    $region22: #{tpu_custom_call.1} parent=1 // pred_check
      _
    $region23: #{tpu_custom_call.1} parent=1 // pred_check_branch
      %27 = sbr.rel (0) target = $region25
    $region24: #{tpu_custom_call.1} parent=1 // pred_region
      _
    $region25: #{tpu_custom_call.1} parent=1 // pred_fallthru
      _
    // Predicated region
    $region26: #{tpu_custom_call.1} parent=1 // pred_check
      _
    $region27: #{tpu_custom_call.1} parent=1 // pred_check_branch
      %29 = sbr.rel (0) target = $region29
    $region28: #{tpu_custom_call.1} parent=1 // pred_region
      _
    $region29: #{tpu_custom_call.1} parent=1 // pred_fallthru
      _
    // Predicated region
    $region30: #{tpu_custom_call.1} parent=1 // pred_check
      _
    $region31: #{tpu_custom_call.1} parent=1 // pred_check_branch
      %31 = sbr.rel (0) target = $region33
    $region32: #{tpu_custom_call.1} parent=1 // pred_region
      _
    $region33: #{tpu_custom_call.1} parent=1 // pred_fallthru
      _
    %v33 = vld [vmem:[%s1] sm:$0xf]
    %v34 = vld [vmem:[%s1 + $0x4] sm:$0xf]
    %v35 = vld [vmem:[%s1 + $0x8] sm:$0xf]
    %v36 = vld [vmem:[%s1 + $0xc] sm:$0xf]
    %v37 = vld [vmem:[%s1 + $0x10] sm:$0xf]
    %v38 = vld [vmem:[%s1 + $0x14] sm:$0xf]
    %v39 = vld [vmem:[%s1 + $0x18] sm:$0xf]
    %v40 = vld [vmem:[%s1 + $0x1c] sm:$0xf]
    %v41 = vld [vmem:[%s1 + $0x20] sm:$0xf]
    %v42 = vld [vmem:[%s1 + $0x24] sm:$0xf]
    %v43 = vld [vmem:[%s1 + $0x28] sm:$0xf]
    %v44 = vld [vmem:[%s1 + $0x2c] sm:$0xf]
    %v45 = vld [vmem:[%s1 + $0x30] sm:$0xf]
    %v46 = vld [vmem:[%s1 + $0x34] sm:$0xf]
    %v47 = vld [vmem:[%s1 + $0x38] sm:$0xf]
    %v48 = vld [vmem:[%s1 + $0x3c] sm:$0xf]
    %v49 = vld [vmem:[%s0] sm:$0xf]
    %v50 = vld [vmem:[%s2] sm:$0xff]
    %v51 = vld [vmem:[%s2 + $0x8] sm:$0xff]
    %v52 = vld [vmem:[%s2 + $0x10] sm:$0xff]
    %v53 = vld [vmem:[%s2 + $0x18] sm:$0xff]
    %v54 = vld [vmem:[%s3] sm:$0xff]
    %v55 = vld [vmem:[%s3 + $0x8] sm:$0xff]
    %v56 = vld [vmem:[%s3 + $0x10] sm:$0xff]
    %v57 = vld [vmem:[%s3 + $0x18] sm:$0xff]
    %v58 = vpack.c.bf16 %v49, %v49
    %v75 = vunpack.c.l.b16 %v33
    %v76 = vunpack.c.l.b16 %v34
    %v77 = vunpack.c.l.b16 %v35
    %v78 = vunpack.c.l.b16 %v36
    %v79 = vunpack.c.l.b16 %v37
    %v80 = vunpack.c.l.b16 %v38
    %v81 = vunpack.c.l.b16 %v39
    %v82 = vunpack.c.l.b16 %v40
    %v83 = vunpack.c.l.b16 %v41
    %v84 = vunpack.c.l.b16 %v42
    %v85 = vunpack.c.l.b16 %v43
    %v86 = vunpack.c.l.b16 %v44
    %v87 = vunpack.c.l.b16 %v45
    %v88 = vunpack.c.l.b16 %v46
    %v89 = vunpack.c.l.b16 %v47
    %v90 = vunpack.c.l.b16 %v48
    %v91 = vpack.c.b16 %v76, %v75
    %v92 = vpack.c.b16 %v78, %v77
    %v93 = vpack.c.b16 %v80, %v79
    %v94 = vpack.c.b16 %v82, %v81
    %v95 = vpack.c.b16 %v84, %v83
    %v96 = vpack.c.b16 %v86, %v85
    %v97 = vpack.c.b16 %v88, %v87
    %v98 = vpack.c.b16 %v90, %v89
    %107 = vmatprep.subr.bf16.mxu0 0
    %108 = vmatpush1.bf16.msra.mxu0 %v91
    %109 = vmatprep.subr.bf16.mxu0 0
    %110 = vmatpush1.bf16.msra.mxu0 %v92
    %111 = vmatprep.subr.bf16.mxu0 0
    %112 = vmatpush1.bf16.msra.mxu0 %v93
    %113 = vmatprep.subr.bf16.mxu0 0
    %114 = vmatpush1.bf16.msra.mxu0 %v94
    %115 = vmatprep.subr.bf16.mxu0 0
    %116 = vmatpush1.bf16.msra.mxu0 %v95
    %117 = vmatprep.subr.bf16.mxu0 0
    %118 = vmatpush1.bf16.msra.mxu0 %v96
    %119 = vmatprep.subr.bf16.mxu0 0
    %120 = vmatpush1.bf16.msra.mxu0 %v97
    %121 = vmatprep.subr.bf16.mxu0 0
    %122 = vmatpush1.bf16.msra.mxu0 %v98
    %123 = vmatprep.subr.bf16.mxu0 0
    %124 = vmatpush1.bf16.msra.mxu0 0
    %125 = vmatprep.subr.bf16.mxu0 0
    %126 = vmatpush1.bf16.msra.mxu0 0
    %127 = vmatprep.subr.bf16.mxu0 0
    %128 = vmatpush1.bf16.msra.mxu0 0
    %129 = vmatprep.subr.bf16.mxu0 0
    %130 = vmatpush1.bf16.msra.mxu0 0
    %131 = vmatprep.subr.bf16.mxu0 0
    %132 = vmatpush1.bf16.msra.mxu0 0
    %133 = vmatprep.subr.bf16.mxu0 0
    %134 = vmatpush1.bf16.msra.mxu0 0
    %135 = vmatprep.subr.bf16.mxu0 0
    %136 = vmatpush1.bf16.msra.mxu0 0
    %137 = vmatprep.subr.bf16.mxu0 0
    %138 = vmatpush1.bf16.msra.mxu0 0
    %139 = vmatprep.mubr.bf16.mxu0 0
    %140 = vmatmul.mubr.bf16.gmra.mrb[0].mxu0 %v58
    %v141 = vpop.f32.mrb[0].mxu0
    %v142 = vadd.f32 0.0, %v141
    %v143 = vpop.f32.mrb[0].mxu0
    %v144 = vpop.f32.mrb[0].mxu0
    %v145 = vpop.f32.mrb[0].mxu0
    %146 = vdwg.mxu0
    %148 = vset.pattern.permute.xlu0 0
    %149 = vperm.xlu0 %148, %v54
    %v150 = vpop.permute.xlu0 %149
    %153 = vset.pattern.permute.xlu0 0
    %154 = vperm.xlu0 %153, %v55
    %v155 = vpop.permute.xlu0 %154
    %158 = vset.pattern.permute.xlu0 0
    %159 = vperm.xlu0 %158, %v56
    %v160 = vpop.permute.xlu0 %159
    %163 = vset.pattern.permute.xlu0 0
    %164 = vperm.xlu0 %163, %v57
    %v165 = vpop.permute.xlu0 %164
    %vm167 = vcmask 31744
    %v169 = vsel %vm167, %v50, 0
    %v172 = vsel %vm167, %v51, 0
    %v175 = vsel %vm167, %v52, 0
    %v178 = vsel %vm167, %v53, 0
    %vm180 = vcmask 1043456
    %v182 = vsel %vm180, %v142, 0
    %184 = vmatprep.subr.mxu0 0.0
    %185 = vmatpush1.msra.mxu0 %v182
    %186 = vmatprep.subr.mxu0 0.0
    %187 = vmatpush1.msra.mxu0 0.0
    %188 = vmatprep.subr.mxu0 0.0
    %189 = vmatpush1.msra.mxu0 0.0
    %190 = vmatprep.subr.mxu0 0.0
    %191 = vmatpush1.msra.mxu0 0.0
    %192 = vmatprep.subr.mxu0 0.0
    %193 = vmatpush1.msra.mxu0 0.0
    %194 = vmatprep.subr.mxu0 0.0
    %195 = vmatpush1.msra.mxu0 0.0
    %196 = vmatprep.subr.mxu0 0.0
    %197 = vmatpush1.msra.mxu0 0.0
    %198 = vmatprep.subr.mxu0 0.0
    %199 = vmatpush1.msra.mxu0 0.0
    %200 = vmatprep.subr.mxu0 0.0
    %201 = vmatpush1.msra.mxu0 0.0
    %202 = vmatprep.subr.mxu0 0.0
    %203 = vmatpush1.msra.mxu0 0.0
    %204 = vmatprep.subr.mxu0 0.0
    %205 = vmatpush1.msra.mxu0 0.0
    %206 = vmatprep.subr.mxu0 0.0
    %207 = vmatpush1.msra.mxu0 0.0
    %208 = vmatprep.subr.mxu0 0.0
    %209 = vmatpush1.msra.mxu0 0.0
    %210 = vmatprep.subr.mxu0 0.0
    %211 = vmatpush1.msra.mxu0 0.0
    %212 = vmatprep.subr.mxu0 0.0
    %213 = vmatpush1.msra.mxu0 0.0
    %214 = vmatprep.subr.mxu0 0.0
    %215 = vmatpush1.msra.mxu0 0.0
    %216 = vmatprep.subr.mxu0 0.0
    %217 = vmatpush1.msra.mxu0 0.0
    %218 = vmatprep.subr.mxu0 0.0
    %219 = vmatpush1.msra.mxu0 0.0
    %220 = vmatprep.subr.mxu0 0.0
    %221 = vmatpush1.msra.mxu0 0.0
    %222 = vmatprep.subr.mxu0 0.0
    %223 = vmatpush1.msra.mxu0 0.0
    %224 = vmatprep.subr.mxu0 0.0
    %225 = vmatpush1.msra.mxu0 0.0
    %226 = vmatprep.subr.mxu0 0.0
    %227 = vmatpush1.msra.mxu0 0.0
    %228 = vmatprep.subr.mxu0 0.0
    %229 = vmatpush1.msra.mxu0 0.0
    %230 = vmatprep.subr.mxu0 0.0
    %231 = vmatpush1.msra.mxu0 0.0
    %232 = vmatprep.subr.mxu0 0.0
    %233 = vmatpush1.msra.mxu0 0.0
    %234 = vmatprep.subr.mxu0 0.0
    %235 = vmatpush1.msra.mxu0 0.0
    %236 = vmatprep.subr.mxu0 0.0
    %237 = vmatpush1.msra.mxu0 0.0
    %238 = vmatprep.subr.mxu0 0.0
    %239 = vmatpush1.msra.mxu0 0.0
    %240 = vmatprep.subr.mxu0 0.0
    %241 = vmatpush1.msra.mxu0 0.0
    %242 = vmatprep.subr.mxu0 0.0
    %243 = vmatpush1.msra.mxu0 0.0
    %244 = vmatprep.subr.mxu0 0.0
    %245 = vmatpush1.msra.mxu0 0.0
    %246 = vmatprep.subr.mxu0 0.0
    %247 = vmatpush1.msra.mxu0 0.0
    %248 = vmatprep.mubr.f32.mxu0 0.0
    %249 = vmatmul.mubr.f32.gmra.mrb[0].mxu0 %v169
    %v250 = vpop.f32.mrb[0].mxu0
    %v251 = vadd.f32 %v150, %v250
    %v252 = vpop.f32.mrb[0].mxu0
    %253 = vmatprep.mubr.f32.mxu0 0.0
    %254 = vmatmul.mubr.f32.gmra.mrb[0].mxu0 %v172
    %v255 = vpop.f32.mrb[0].mxu0
    %v256 = vadd.f32 %v155, %v255
    %v257 = vpop.f32.mrb[0].mxu0
    %258 = vmatprep.mubr.f32.mxu0 0.0
    %259 = vmatmul.mubr.f32.gmra.mrb[0].mxu0 %v175
    %v260 = vpop.f32.mrb[0].mxu0
    %v261 = vadd.f32 %v160, %v260
    %v262 = vpop.f32.mrb[0].mxu0
    %263 = vmatprep.mubr.f32.mxu0 0.0
    %264 = vmatmul.mubr.f32.gmra.mrb[0].mxu0 %v178
    %v265 = vpop.f32.mrb[0].mxu0
    %v266 = vadd.f32 %v165, %v265
    %v267 = vpop.f32.mrb[0].mxu0
    %268 = vdwg.mxu0
    %v269 = vmax.f32 %v251, 0.0
    %v270 = vmax.f32 %v256, 0.0
    %v271 = vmax.f32 %v261, 0.0
    %v272 = vmax.f32 %v266, 0.0
    %v273 = vld [vmem:[%s4] sm:$0xff]
    %v274 = vld [vmem:[%s4 + $0x8] sm:$0xff]
    %v275 = vld [vmem:[%s4 + $0x10] sm:$0xff]
    %v276 = vld [vmem:[%s4 + $0x18] sm:$0xff]
    %v277 = vld [vmem:[%s5] sm:$0xff]
    %v278 = vld [vmem:[%s5 + $0x8] sm:$0xff]
    %v279 = vld [vmem:[%s5 + $0x10] sm:$0xff]
    %v280 = vld [vmem:[%s5 + $0x18] sm:$0xff]
    %v281 = vpack.c.bf16 %v270, %v269
    %v282 = vpack.c.bf16 %v272, %v271
    %283 = vmatprep.subr.bf16.mxu0 0
    %284 = vmatpush1.bf16.msra.mxu0 %v91
    %285 = vmatprep.subr.bf16.mxu0 0
    %286 = vmatpush1.bf16.msra.mxu0 %v92
    %287 = vmatprep.subr.bf16.mxu0 0
    %288 = vmatpush1.bf16.msra.mxu0 %v93
    %289 = vmatprep.subr.bf16.mxu0 0
    %290 = vmatpush1.bf16.msra.mxu0 %v94
    %291 = vmatprep.subr.bf16.mxu0 0
    %292 = vmatpush1.bf16.msra.mxu0 %v95
    %293 = vmatprep.subr.bf16.mxu0 0
    %294 = vmatpush1.bf16.msra.mxu0 %v96
    %295 = vmatprep.subr.bf16.mxu0 0
    %296 = vmatpush1.bf16.msra.mxu0 %v97
    %297 = vmatprep.subr.bf16.mxu0 0
    %298 = vmatpush1.bf16.msra.mxu0 %v98
    %299 = vmatprep.subr.bf16.mxu0 0
    %300 = vmatpush1.bf16.msra.mxu0 0
    %301 = vmatprep.subr.bf16.mxu0 0
    %302 = vmatpush1.bf16.msra.mxu0 0
    %303 = vmatprep.subr.bf16.mxu0 0
    %304 = vmatpush1.bf16.msra.mxu0 0
    %305 = vmatprep.subr.bf16.mxu0 0
    %306 = vmatpush1.bf16.msra.mxu0 0
    %307 = vmatprep.subr.bf16.mxu0 0
    %308 = vmatpush1.bf16.msra.mxu0 0
    %309 = vmatprep.subr.bf16.mxu0 0
    %310 = vmatpush1.bf16.msra.mxu0 0
    %311 = vmatprep.subr.bf16.mxu0 0
    %312 = vmatpush1.bf16.msra.mxu0 0
    %313 = vmatprep.subr.bf16.mxu0 0
    %314 = vmatpush1.bf16.msra.mxu0 0
    %315 = vmatprep.mubr.bf16.mxu0 0
    %316 = vmatmul.mubr.bf16.gmra.mrb[0].mxu0 %v281
    %v317 = vpop.f32.mrb[0].mxu0
    %v318 = vadd.f32 0.0, %v317
    %v319 = vpop.f32.mrb[0].mxu0
    %v320 = vpop.f32.mrb[0].mxu0
    %v321 = vadd.f32 0.0, %v320
    %v322 = vpop.f32.mrb[0].mxu0
    %323 = vmatprep.mubr.bf16.mxu0 0
    %324 = vmatmul.mubr.bf16.gmra.mrb[0].mxu0 %v282
    %v325 = vpop.f32.mrb[0].mxu0
    %v326 = vadd.f32 0.0, %v325
    %v327 = vpop.f32.mrb[0].mxu0
    %v328 = vpop.f32.mrb[0].mxu0
    %v329 = vadd.f32 0.0, %v328
    %v330 = vpop.f32.mrb[0].mxu0
    %331 = vdwg.mxu0
    %333 = vset.pattern.permute.xlu0 0
    %334 = vperm.xlu0 %333, %v277
    %v335 = vpop.permute.xlu0 %334
    %338 = vset.pattern.permute.xlu0 0
    %339 = vperm.xlu0 %338, %v278
    %v340 = vpop.permute.xlu0 %339
    %343 = vset.pattern.permute.xlu0 0
    %344 = vperm.xlu0 %343, %v279
    %v345 = vpop.permute.xlu0 %344
    %348 = vset.pattern.permute.xlu0 0
    %349 = vperm.xlu0 %348, %v280
    %v350 = vpop.permute.xlu0 %349
    %vm352 = vcmask 261120
    %v354 = vsel %vm352, %v273, 0
    %v357 = vsel %vm352, %v274, 0
    %v360 = vsel %vm352, %v275, 0
    %v363 = vsel %vm352, %v276, 0
    %365 = vmatprep.subr.mxu0 0.0
    %366 = vmatpush1.msra.mxu0 %v318
    %367 = vmatprep.subr.mxu0 0.0
    %368 = vmatpush1.msra.mxu0 %v321
    %369 = vmatprep.subr.mxu0 0.0
    %370 = vmatpush1.msra.mxu0 %v326
    %371 = vmatprep.subr.mxu0 0.0
    %372 = vmatpush1.msra.mxu0 %v329
    %373 = vmatprep.subr.mxu0 0.0
    %374 = vmatpush1.msra.mxu0 0.0
    %375 = vmatprep.subr.mxu0 0.0
    %376 = vmatpush1.msra.mxu0 0.0
    %377 = vmatprep.subr.mxu0 0.0
    %378 = vmatpush1.msra.mxu0 0.0
    %379 = vmatprep.subr.mxu0 0.0
    %380 = vmatpush1.msra.mxu0 0.0
    %381 = vmatprep.subr.mxu0 0.0
    %382 = vmatpush1.msra.mxu0 0.0
    %383 = vmatprep.subr.mxu0 0.0
    %384 = vmatpush1.msra.mxu0 0.0
    %385 = vmatprep.subr.mxu0 0.0
    %386 = vmatpush1.msra.mxu0 0.0
    %387 = vmatprep.subr.mxu0 0.0
    %388 = vmatpush1.msra.mxu0 0.0
    %389 = vmatprep.subr.mxu0 0.0
    %390 = vmatpush1.msra.mxu0 0.0
    %391 = vmatprep.subr.mxu0 0.0
    %392 = vmatpush1.msra.mxu0 0.0
    %393 = vmatprep.subr.mxu0 0.0
    %394 = vmatpush1.msra.mxu0 0.0
    %395 = vmatprep.subr.mxu0 0.0
    %396 = vmatpush1.msra.mxu0 0.0
    %397 = vmatprep.subr.mxu0 0.0
    %398 = vmatpush1.msra.mxu0 0.0
    %399 = vmatprep.subr.mxu0 0.0
    %400 = vmatpush1.msra.mxu0 0.0
    %401 = vmatprep.subr.mxu0 0.0
    %402 = vmatpush1.msra.mxu0 0.0
    %403 = vmatprep.subr.mxu0 0.0
    %404 = vmatpush1.msra.mxu0 0.0
    %405 = vmatprep.subr.mxu0 0.0
    %406 = vmatpush1.msra.mxu0 0.0
    %407 = vmatprep.subr.mxu0 0.0
    %408 = vmatpush1.msra.mxu0 0.0
    %409 = vmatprep.subr.mxu0 0.0
    %410 = vmatpush1.msra.mxu0 0.0
    %411 = vmatprep.subr.mxu0 0.0
    %412 = vmatpush1.msra.mxu0 0.0
    %413 = vmatprep.subr.mxu0 0.0
    %414 = vmatpush1.msra.mxu0 0.0
    %415 = vmatprep.subr.mxu0 0.0
    %416 = vmatpush1.msra.mxu0 0.0
    %417 = vmatprep.subr.mxu0 0.0
    %418 = vmatpush1.msra.mxu0 0.0
    %419 = vmatprep.subr.mxu0 0.0
    %420 = vmatpush1.msra.mxu0 0.0
    %421 = vmatprep.subr.mxu0 0.0
    %422 = vmatpush1.msra.mxu0 0.0
    %423 = vmatprep.subr.mxu0 0.0
    %424 = vmatpush1.msra.mxu0 0.0
    %425 = vmatprep.subr.mxu0 0.0
    %426 = vmatpush1.msra.mxu0 0.0
    %427 = vmatprep.subr.mxu0 0.0
    %428 = vmatpush1.msra.mxu0 0.0
    %429 = vmatprep.mubr.f32.mxu0 0.0
    %430 = vmatmul.mubr.f32.gmra.mrb[0].mxu0 %v354
    %v431 = vpop.f32.mrb[0].mxu0
    %v432 = vadd.f32 %v335, %v431
    %v433 = vpop.f32.mrb[0].mxu0
    %434 = vmatprep.mubr.f32.mxu0 0.0
    %435 = vmatmul.mubr.f32.gmra.mrb[0].mxu0 %v357
    %v436 = vpop.f32.mrb[0].mxu0
    %v437 = vadd.f32 %v340, %v436
    %v438 = vpop.f32.mrb[0].mxu0
    %439 = vmatprep.mubr.f32.mxu0 0.0
    %440 = vmatmul.mubr.f32.gmra.mrb[0].mxu0 %v360
    %v441 = vpop.f32.mrb[0].mxu0
    %v442 = vadd.f32 %v345, %v441
    %v443 = vpop.f32.mrb[0].mxu0
    %444 = vmatprep.mubr.f32.mxu0 0.0
    %445 = vmatmul.mubr.f32.gmra.mrb[0].mxu0 %v363
    %v446 = vpop.f32.mrb[0].mxu0
    %v447 = vadd.f32 %v350, %v446
    %v448 = vpop.f32.mrb[0].mxu0
    %449 = vdwg.mxu0
    %v450 = vmax.f32 %v432, 0.0
    %v451 = vmax.f32 %v437, 0.0
    %v452 = vmax.f32 %v442, 0.0
    %v453 = vmax.f32 %v447, 0.0
    %v454 = vld [vmem:[%s6] sm:$0x1]
    %v455 = vld [vmem:[#allocation2] sm:$0x1]
    %v457 = vsel %vm352, %v454, 0
    %459 = vmatprep.subr.mxu0 0.0
    %460 = vmatpush1.msra.mxu0 %v450
    %461 = vmatprep.subr.mxu0 0.0
    %462 = vmatpush1.msra.mxu0 %v451
    %463 = vmatprep.subr.mxu0 0.0
    %464 = vmatpush1.msra.mxu0 %v452
    %465 = vmatprep.subr.mxu0 0.0
    %466 = vmatpush1.msra.mxu0 %v453
    %467 = vmatprep.subr.mxu0 0.0
    %468 = vmatpush1.msra.mxu0 0.0
    %469 = vmatprep.subr.mxu0 0.0
    %470 = vmatpush1.msra.mxu0 0.0
    %471 = vmatprep.subr.mxu0 0.0
    %472 = vmatpush1.msra.mxu0 0.0
    %473 = vmatprep.subr.mxu0 0.0
    %474 = vmatpush1.msra.mxu0 0.0
    %475 = vmatprep.subr.mxu0 0.0
    %476 = vmatpush1.msra.mxu0 0.0
    %477 = vmatprep.subr.mxu0 0.0
    %478 = vmatpush1.msra.mxu0 0.0
    %479 = vmatprep.subr.mxu0 0.0
    %480 = vmatpush1.msra.mxu0 0.0
    %481 = vmatprep.subr.mxu0 0.0
    %482 = vmatpush1.msra.mxu0 0.0
    %483 = vmatprep.subr.mxu0 0.0
    %484 = vmatpush1.msra.mxu0 0.0
    %485 = vmatprep.subr.mxu0 0.0
    %486 = vmatpush1.msra.mxu0 0.0
    %487 = vmatprep.subr.mxu0 0.0
    %488 = vmatpush1.msra.mxu0 0.0
    %489 = vmatprep.subr.mxu0 0.0
    %490 = vmatpush1.msra.mxu0 0.0
    %491 = vmatprep.subr.mxu0 0.0
    %492 = vmatpush1.msra.mxu0 0.0
    %493 = vmatprep.subr.mxu0 0.0
    %494 = vmatpush1.msra.mxu0 0.0
    %495 = vmatprep.subr.mxu0 0.0
    %496 = vmatpush1.msra.mxu0 0.0
    %497 = vmatprep.subr.mxu0 0.0
    %498 = vmatpush1.msra.mxu0 0.0
    %499 = vmatprep.subr.mxu0 0.0
    %500 = vmatpush1.msra.mxu0 0.0
    %501 = vmatprep.subr.mxu0 0.0
    %502 = vmatpush1.msra.mxu0 0.0
    %503 = vmatprep.subr.mxu0 0.0
    %504 = vmatpush1.msra.mxu0 0.0
    %505 = vmatprep.subr.mxu0 0.0
    %506 = vmatpush1.msra.mxu0 0.0
    %507 = vmatprep.subr.mxu0 0.0
    %508 = vmatpush1.msra.mxu0 0.0
    %509 = vmatprep.subr.mxu0 0.0
    %510 = vmatpush1.msra.mxu0 0.0
    %511 = vmatprep.subr.mxu0 0.0
    %512 = vmatpush1.msra.mxu0 0.0
    %513 = vmatprep.subr.mxu0 0.0
    %514 = vmatpush1.msra.mxu0 0.0
    %515 = vmatprep.subr.mxu0 0.0
    %516 = vmatpush1.msra.mxu0 0.0
    %517 = vmatprep.subr.mxu0 0.0
    %518 = vmatpush1.msra.mxu0 0.0
    %519 = vmatprep.subr.mxu0 0.0
    %520 = vmatpush1.msra.mxu0 0.0
    %521 = vmatprep.subr.mxu0 0.0
    %522 = vmatpush1.msra.mxu0 0.0
    %523 = vmatprep.mubr.f32.mxu0 0.0
    %524 = vmatmul.mubr.f32.gmra.mrb[0].mxu0 %v457
    %v525 = vpop.f32.mrb[0].mxu0
    %v526 = vadd.f32 0.0, %v525
    %v527 = vpop.f32.mrb[0].mxu0
    %528 = vdwg.mxu0
    %v529 = vpack.c.bf16 %v526, %v526
    %531 = vset.pattern.permute.xlu0 0
    %532 = vperm.xlu0 %531, %v455
    %v533 = vpop.permute.xlu0 %532
    %v535 = vlaneseq
    %v536 = vshrl.u32 %v535, 7
    %v537 = vsub.s32 0, %v536
    %v538 = vrot.slane %v533, %v537
    %539 = vmatprep.subr.bf16.mxu0 0
    %540 = vmatpush1.bf16.msra.mxu0 %v91
    %541 = vmatprep.subr.bf16.mxu0 0
    %542 = vmatpush1.bf16.msra.mxu0 %v92
    %543 = vmatprep.subr.bf16.mxu0 0
    %544 = vmatpush1.bf16.msra.mxu0 %v93
    %545 = vmatprep.subr.bf16.mxu0 0
    %546 = vmatpush1.bf16.msra.mxu0 %v94
    %547 = vmatprep.subr.bf16.mxu0 0
    %548 = vmatpush1.bf16.msra.mxu0 %v95
    %549 = vmatprep.subr.bf16.mxu0 0
    %550 = vmatpush1.bf16.msra.mxu0 %v96
    %551 = vmatprep.subr.bf16.mxu0 0
    %552 = vmatpush1.bf16.msra.mxu0 %v97
    %553 = vmatprep.subr.bf16.mxu0 0
    %554 = vmatpush1.bf16.msra.mxu0 %v98
    %555 = vmatprep.subr.bf16.mxu0 0
    %556 = vmatpush1.bf16.msra.mxu0 0
    %557 = vmatprep.subr.bf16.mxu0 0
    %558 = vmatpush1.bf16.msra.mxu0 0
    %559 = vmatprep.subr.bf16.mxu0 0
    %560 = vmatpush1.bf16.msra.mxu0 0
    %561 = vmatprep.subr.bf16.mxu0 0
    %562 = vmatpush1.bf16.msra.mxu0 0
    %563 = vmatprep.subr.bf16.mxu0 0
    %564 = vmatpush1.bf16.msra.mxu0 0
    %565 = vmatprep.subr.bf16.mxu0 0
    %566 = vmatpush1.bf16.msra.mxu0 0
    %567 = vmatprep.subr.bf16.mxu0 0
    %568 = vmatpush1.bf16.msra.mxu0 0
    %569 = vmatprep.subr.bf16.mxu0 0
    %570 = vmatpush1.bf16.msra.mxu0 0
    %571 = vmatprep.mubr.bf16.mxu0 0
    %572 = vmatmul.mubr.bf16.gmra.mrb[0].mxu0 %v529
    %v573 = vpop.f32.mrb[0].mxu0
    %v574 = vadd.f32 %v538, %v573
    %v575 = vpop.f32.mrb[0].mxu0
    %v576 = vpop.f32.mrb[0].mxu0
    %v577 = vpop.f32.mrb[0].mxu0
    %578 = vdwg.mxu0
    %v579 = vxor.u32 %v574, 2147483648
    %v580 = vmul.f32 %v579, 1.442695
    %v581 = vpow.pop %v580
    %v582 = vadd.f32 %v581, 1.0
    %v583 = vrcp.pop %v582
    %v584 = vmul.f32 1.0, %v583
    %585 = vst [vmem:[#allocation3] sm:$0x1] %v584
    // Predicated region
    $region34: #{tpu_custom_call.1} parent=1 // pred_check
      _
    $region35: #{tpu_custom_call.1} parent=1 // pred_check_branch
      %587 = sbr.rel (0) target = $region37
    $region36: #{tpu_custom_call.1} parent=1 // pred_region
      %s589 = ssub.s32 16, 16
      %590 = vsyncadd [#allocation4], %s589
      %s592 = sshll.u32 [#allocation3], 4
      %s593 = int_to_ptr.vmem [resolvable:$true] %s592
      %595 = dma.vmem_to_hbm [thread:$0]  %s593, 16, %s8, [#allocation4]
    $region37: #{tpu_custom_call.1} parent=1 // pred_fallthru
      _
    // Predicated region
    $region38: #{tpu_custom_call.1} parent=1 // pred_check
      _
    $region39: #{tpu_custom_call.1} parent=1 // pred_check_branch
      %597 = sbr.rel (0) target = $region41
    $region40: #{tpu_custom_call.1} parent=1 // pred_region
      %598 = dma.done [#allocation4], 16
    $region41: #{tpu_custom_call.1} parent=1 // pred_fallthru
      _
    %599 = vsyncpa [#allocation4], 1

</llo_original>
